<compile_context>
chip_gen: v6e
topology: v6e:2x2x1
jax: 0.10.0
libtpu: 0.0.40
codegen_flags: <defaults>
</compile_context>

<pallas_src>
import jax
import jax.numpy as jnp
from jax.experimental import pallas as pl
from jax.experimental.pallas import tpu as pltpu


def lstm_cell_kernel(x_ref, h_ref, c_ref, wx_ref, wh_ref, b_ref, hc_out_ref):
    L = c_ref.shape[-1]

    # Cast activations to the weight dtype for the MXU (f32 by default,
    # bf16 if prepare_lstm_weights was given matmul_dtype=bf16).
    x = x_ref[...].astype(wx_ref.dtype)
    h = h_ref[...].astype(wh_ref.dtype)
    c = c_ref[...]

    # Single fused projection: (B, 4L) = [hidden | forgot | output | memory]
    gates = (
        jnp.dot(x, wx_ref[...], preferred_element_type=jnp.float32)
        + jnp.dot(h, wh_ref[...], preferred_element_type=jnp.float32)
        + b_ref[...]
    )

    # One sigmoid over the 3L-wide slab, one tanh over the last L lanes.
    sig = jax.nn.sigmoid(gates[:, : 3 * L])
    memory_state = jnp.tanh(gates[:, 3 * L:])

    hidden_state = sig[:, 0 * L:1 * L]
    forgot_state = sig[:, 1 * L:2 * L]
    output_state = sig[:, 2 * L:3 * L]

    c_new = forgot_state * c + hidden_state * memory_state
    h_new = output_state * jnp.tanh(c_new)

    # One lane-dense (B, 2L) store instead of two narrow ones.
    hc_out_ref[...] = jnp.concatenate([h_new, c_new], axis=-1).astype(
        hc_out_ref.dtype
    )


def prepare_lstm_weights(w_weight, w_bias, m_weight, m_bias, input_dim,
                         matmul_dtype=None):
    """Fuse + pre-transpose the two Linear layers.  Call ONCE at model build.

    w_weight: (3*latent_dim, input_dim + latent_dim)   (PyTorch Linear layout)
    w_bias:   (3*latent_dim,)
    m_weight: (latent_dim, input_dim + latent_dim)
    m_bias:   (latent_dim,)

    Returns wx (input_dim, 4L), wh (latent_dim, 4L), b (1, 4L).
    Column order: [hidden | forgot | output | memory], matching the kernel.
    """
    fusedT = jnp.concatenate([w_weight, m_weight], axis=0).T   # (concat, 4L)
    wx = fusedT[:input_dim]                                    # (input_dim, 4L)
    wh = fusedT[input_dim:]                                    # (latent_dim, 4L)
    b = jnp.concatenate([w_bias, m_bias]).reshape(1, -1)       # (1, 4L), f32
    if matmul_dtype is not None:
        wx = wx.astype(matmul_dtype)
        wh = wh.astype(matmul_dtype)
    return wx, wh, b


def lstm_cell(x, h, c, wx, wh, b, *, block_b=256):
    """One LSTMCell step with pre-fused weights (see prepare_lstm_weights)."""
    B, input_dim = x.shape
    L = h.shape[-1]

    # Batch tile: full batch if small, otherwise a multiple of the 8-row
    # sublane granule so every tile is layout-aligned.
    if B <= block_b:
        bb = B
    else:
        bb = (block_b // 8) * 8
    grid = (pl.cdiv(B, bb),)

    concat_dim = input_dim + L
    flops_per_row = 2 * concat_dim * 4 * L + 10 * L        # matmuls + gate math
    cost = pl.CostEstimate(
        flops=B * flops_per_row,
        transcendentals=B * 5 * L,                          # 3 sigmoid + 2 tanh
        bytes_accessed=4 * (
            B * (input_dim + 2 * L)                         # x, h, c in
            + (input_dim + L + 1) * 4 * L                   # weights + bias
            + B * 2 * L                                     # packed h|c out
        ),
    )

    hc = pl.pallas_call(
        lstm_cell_kernel,
        out_shape=jax.ShapeDtypeStruct((B, 2 * L), x.dtype),
        grid=grid,
        in_specs=[
            pl.BlockSpec((bb, input_dim), lambda i: (i, 0)),     # x
            pl.BlockSpec((bb, L), lambda i: (i, 0)),             # h
            pl.BlockSpec((bb, L), lambda i: (i, 0)),             # c
            pl.BlockSpec((input_dim, 4 * L), lambda i: (0, 0)),  # Wx (resident)
            pl.BlockSpec((L, 4 * L), lambda i: (0, 0)),          # Wh (resident)
            pl.BlockSpec((1, 4 * L), lambda i: (0, 0)),          # bias
        ],
        out_specs=pl.BlockSpec((bb, 2 * L), lambda i: (i, 0)),
        compiler_params=pltpu.CompilerParams(
            dimension_semantics=("parallel",),
        ),
        cost_estimate=cost,
    )(x, h, c, wx, wh, b)

    return hc[:, :L], hc[:, L:]


def lstm_cell_ref(x, h, c, w_weight, w_bias, m_weight, m_bias):
    """Pure-JAX reference matching the PyTorch forward exactly."""
    latent_dim = h.shape[-1]
    h_tilde = jnp.concatenate([x, h], axis=-1)
    fused_state = jax.nn.sigmoid(h_tilde @ w_weight.T + w_bias)
    memory_state = jnp.tanh(h_tilde @ m_weight.T + m_bias)
    hidden_state = fused_state[:, 0 * latent_dim:1 * latent_dim]
    forgot_state = fused_state[:, 1 * latent_dim:2 * latent_dim]
    output_state = fused_state[:, 2 * latent_dim:3 * latent_dim]
    c_new = forgot_state * c + hidden_state * memory_state
    h_new = output_state * jnp.tanh(c_new)
    return h_new, c_new


if __name__ == "__main__":
    # Small deterministic problem: batch=8, input_dim=16, latent_dim=32 (4L=128).
    B, input_dim, latent_dim = 8, 16, 32
    concat_dim = input_dim + latent_dim

    key = jax.random.PRNGKey(0)
    kx, kh, kc, kw, kbw, km, kbm = jax.random.split(key, 7)

    x = jax.random.normal(kx, (B, input_dim), dtype=jnp.float32)
    h = jax.random.normal(kh, (B, latent_dim), dtype=jnp.float32)
    c = jax.random.normal(kc, (B, latent_dim), dtype=jnp.float32)

    # Deterministic parameter init (PyTorch Linear-style uniform bounds).
    bound_w = 1.0 / jnp.sqrt(concat_dim)
    w_weight = jax.random.uniform(kw, (3 * latent_dim, concat_dim),
                                  minval=-bound_w, maxval=bound_w,
                                  dtype=jnp.float32)
    w_bias = jax.random.uniform(kbw, (3 * latent_dim,),
                                minval=-bound_w, maxval=bound_w,
                                dtype=jnp.float32)
    m_weight = jax.random.uniform(km, (latent_dim, concat_dim),
                                  minval=-bound_w, maxval=bound_w,
                                  dtype=jnp.float32)
    m_bias = jax.random.uniform(kbm, (latent_dim,),
                                minval=-bound_w, maxval=bound_w,
                                dtype=jnp.float32)

    # Fuse / transpose the weights ONCE (not per timestep).
    # (Use matmul_dtype=jnp.bfloat16 here on v6e/v7x for the bf16 MXU path.)
    wx, wh, b = prepare_lstm_weights(w_weight, w_bias, m_weight, m_bias,
                                     input_dim, matmul_dtype=None)

    h_new, c_new = lstm_cell(x, h, c, wx, wh, b)
    jax.block_until_ready((h_new, c_new))

    h_ref, c_ref = lstm_cell_ref(x, h, c, w_weight, w_bias, m_weight, m_bias)
    assert jnp.allclose(h_new, h_ref, atol=1e-5, rtol=1e-5), "h mismatch"
    assert jnp.allclose(c_new, c_ref, atol=1e-5, rtol=1e-5), "c mismatch"

    print("KERNEL_OK")
</pallas_src>

<mosaic_0001>
module attributes {stable_mosaic.version = 11 : i64} {
  func.func @lstm_cell_kernel(%arg0: i32, %arg1: memref<8x16xf32, #tpu.memory_space<vmem>>, %arg2: memref<8x32xf32, #tpu.memory_space<vmem>>, %arg3: memref<8x32xf32, #tpu.memory_space<vmem>>, %arg4: memref<16x128xf32, #tpu.memory_space<vmem>>, %arg5: memref<32x128xf32, #tpu.memory_space<vmem>>, %arg6: memref<1x128xf32, #tpu.memory_space<vmem>>, %arg7: memref<8x64xf32, #tpu.memory_space<vmem>>) attributes {dimension_semantics = [#tpu.dimension_semantics<parallel>], iteration_bounds = array<i64: 1>, scalar_prefetch = 0 : i64, scratch_operands = 0 : i64, tpu.core_type = #tpu.core_type<tc>, window_params = [{transform_indices = @transform_0, window_bounds = array<i64: 8, 16>}, {transform_indices = @transform_1, window_bounds = array<i64: 8, 32>}, {transform_indices = @transform_2, window_bounds = array<i64: 8, 32>}, {pipeline_mode = #tpu.pipeline_mode<synchronous>, transform_indices = @transform_3, window_bounds = array<i64: 16, 128>}, {pipeline_mode = #tpu.pipeline_mode<synchronous>, transform_indices = @transform_4, window_bounds = array<i64: 32, 128>}, {pipeline_mode = #tpu.pipeline_mode<synchronous>, transform_indices = @transform_5, window_bounds = array<i64: 1, 128>}, {transform_indices = @transform_6, window_bounds = array<i64: 8, 64>}]} {
    %c0 = arith.constant 0 : index
    %c0_0 = arith.constant 0 : index
    %0 = vector.load %arg1[%c0, %c0_0] : memref<8x16xf32, #tpu.memory_space<vmem>>, vector<8x16xf32>
    %c0_1 = arith.constant 0 : index
    %c0_2 = arith.constant 0 : index
    %1 = vector.load %arg2[%c0_1, %c0_2] : memref<8x32xf32, #tpu.memory_space<vmem>>, vector<8x32xf32>
    %c0_3 = arith.constant 0 : index
    %c0_4 = arith.constant 0 : index
    %2 = vector.load %arg3[%c0_3, %c0_4] : memref<8x32xf32, #tpu.memory_space<vmem>>, vector<8x32xf32>
    %c0_5 = arith.constant 0 : index
    %c0_6 = arith.constant 0 : index
    %3 = vector.load %arg4[%c0_5, %c0_6] : memref<16x128xf32, #tpu.memory_space<vmem>>, vector<16x128xf32>
    %cst = arith.constant dense<0.000000e+00> : vector<8x128xf32>
    %4 = tpu.matmul %0, %3, %cst {dimension_numbers = #tpu.dot_dimension_numbers<[1], [0], [0], [1], [0, 0, 1, 1], [], []>} : vector<8x16xf32>, vector<16x128xf32>, vector<8x128xf32> -> vector<8x128xf32>
    %c0_7 = arith.constant 0 : index
    %c0_8 = arith.constant 0 : index
    %5 = vector.load %arg5[%c0_7, %c0_8] : memref<32x128xf32, #tpu.memory_space<vmem>>, vector<32x128xf32>
    %cst_9 = arith.constant dense<0.000000e+00> : vector<8x128xf32>
    %6 = tpu.matmul %1, %5, %cst_9 {dimension_numbers = #tpu.dot_dimension_numbers<[1], [0], [0], [1], [0, 0, 1, 1], [], []>} : vector<8x32xf32>, vector<32x128xf32>, vector<8x128xf32> -> vector<8x128xf32>
    %7 = arith.addf %4, %6 : vector<8x128xf32>
    %c0_10 = arith.constant 0 : index
    %c0_11 = arith.constant 0 : index
    %8 = vector.load %arg6[%c0_10, %c0_11] : memref<1x128xf32, #tpu.memory_space<vmem>>, vector<1x128xf32>
    %9 = vector.broadcast %8 : vector<1x128xf32> to vector<8x128xf32>
    %10 = arith.addf %7, %9 : vector<8x128xf32>
    %11 = vector.extract_strided_slice %10 {offsets = [0, 0], sizes = [8, 96], strides = [1, 1]} : vector<8x128xf32> to vector<8x96xf32>
    %12 = arith.negf %11 : vector<8x96xf32>
    %13 = math.exp %12 : vector<8x96xf32>
    %cst_12 = arith.constant 1.000000e+00 : f32
    %14 = vector.broadcast %cst_12 : f32 to vector<8x96xf32>
    %15 = arith.addf %14, %13 : vector<8x96xf32>
    %16 = arith.divf %14, %15 : vector<8x96xf32>
    %17 = vector.extract_strided_slice %10 {offsets = [0, 96], sizes = [8, 32], strides = [1, 1]} : vector<8x128xf32> to vector<8x32xf32>
    %18 = math.tanh %17 : vector<8x32xf32>
    %19 = vector.extract_strided_slice %16 {offsets = [0, 0], sizes = [8, 32], strides = [1, 1]} : vector<8x96xf32> to vector<8x32xf32>
    %20 = vector.extract_strided_slice %16 {offsets = [0, 32], sizes = [8, 32], strides = [1, 1]} : vector<8x96xf32> to vector<8x32xf32>
    %21 = vector.extract_strided_slice %16 {offsets = [0, 64], sizes = [8, 32], strides = [1, 1]} : vector<8x96xf32> to vector<8x32xf32>
    %22 = arith.mulf %20, %2 : vector<8x32xf32>
    %23 = arith.mulf %19, %18 : vector<8x32xf32>
    %24 = arith.addf %22, %23 : vector<8x32xf32>
    %25 = math.tanh %24 : vector<8x32xf32>
    %26 = arith.mulf %21, %25 : vector<8x32xf32>
    %27 = tpu.concatenate %26, %24 in 1 : vector<8x32xf32>, vector<8x32xf32> -> vector<8x64xf32>
    %c0_13 = arith.constant 0 : index
    %c0_14 = arith.constant 0 : index
    %28 = vector.load %arg7[%c0_13, %c0_14] : memref<8x64xf32, #tpu.memory_space<vmem>>, vector<8x64xf32>
    tpu.vector_store %arg7[%c0_13, %c0_14], %27 {strides = array<i32>} : memref<8x64xf32, #tpu.memory_space<vmem>>, vector<8x64xf32>,
    return
  }
  func.func @transform_0(%arg0: i32) -> (i32, i32) {
    %c0_i32 = arith.constant 0 : i32
    %c0_i32_0 = arith.constant 0 : i32
    return %arg0, %c0_i32 : i32, i32
  }
  func.func @transform_1(%arg0: i32) -> (i32, i32) {
    %c0_i32 = arith.constant 0 : i32
    %c0_i32_0 = arith.constant 0 : i32
    return %arg0, %c0_i32 : i32, i32
  }
  func.func @transform_2(%arg0: i32) -> (i32, i32) {
    %c0_i32 = arith.constant 0 : i32
    %c0_i32_0 = arith.constant 0 : i32
    return %arg0, %c0_i32 : i32, i32
  }
  func.func @transform_3(%arg0: i32) -> (i32, i32) {
    %c0_i32 = arith.constant 0 : i32
    %c0_i32_0 = arith.constant 0 : i32
    %c0_i32_1 = arith.constant 0 : i32
    return %c0_i32, %c0_i32_0 : i32, i32
  }
  func.func @transform_4(%arg0: i32) -> (i32, i32) {
    %c0_i32 = arith.constant 0 : i32
    %c0_i32_0 = arith.constant 0 : i32
    %c0_i32_1 = arith.constant 0 : i32
    return %c0_i32, %c0_i32_0 : i32, i32
  }
  func.func @transform_5(%arg0: i32) -> (i32, i32) {
    %c0_i32 = arith.constant 0 : i32
    %c0_i32_0 = arith.constant 0 : i32
    %c0_i32_1 = arith.constant 0 : i32
    return %c0_i32, %c0_i32_0 : i32, i32
  }
  func.func @transform_6(%arg0: i32) -> (i32, i32) {
    %c0_i32 = arith.constant 0 : i32
    %c0_i32_0 = arith.constant 0 : i32
    return %arg0, %c0_i32 : i32, i32
  }
}

</mosaic_0001>

<llo_original>
// kernel: tpu_custom_call.1
$region0: #{tpu_custom_call.1}
  #allocation0 [shape = 'u32[]', space=smem, size = 0x4, offset = 0x4, fixed_abs, tag = 'smem constant byte address 0x4 - core index']
  #allocation1 [shape = 'u32[144,128]{1,0:T(1,128)}', space=vmem, size = 0x12000, scoped, tag = 'internal scratch']
  %s0 = inlined_call_operand.hbm [shape: f32[8,16], index: 0, kind: input, shape index: {}]
  %s1 = inlined_call_operand.hbm [shape: f32[8,32], index: 1, kind: input, shape index: {}]
  %s2 = inlined_call_operand.hbm [shape: f32[8,32], index: 2, kind: input, shape index: {}]
  %s3 = inlined_call_operand.hbm [shape: f32[16,128], index: 3, kind: input, shape index: {}]
  %s4 = inlined_call_operand.hbm [shape: f32[32,128], index: 4, kind: input, shape index: {}]
  %s5 = inlined_call_operand.vmem [shape: f32[1,128], index: 5, kind: input, shape index: {}]
  %s6 = inlined_call_operand.hbm [shape: f32[8,64], index: 6, kind: output, shape index: {}]
  %s7 = sld [smem:[#allocation0]]
  $region54: #{tpu_custom_call.1} parent=0
    _
  %s9 = ssub.s32 1, %s7
  %s10 = scalar_select 0, %s9, %s7
  $region1: #{tpu_custom_call.1} parent=0
    #allocation2 [shape = 'u8[4096]{0}', space=vmem, size = 0x1000, scoped, tag = 'input window, operand 0, single buffered']
    #allocation3 [shape = 's32[1]{0}', space=sflag, size = 0x4, scoped, tag = 'scoped memory for tpu_custom_call.1']
    #allocation4 [shape = 's32[1]{0}', space=sflag, size = 0x4, scoped, tag = 'scoped memory for tpu_custom_call.1']
    #allocation5 [shape = 'u8[4096]{0}', space=vmem, size = 0x1000, scoped, tag = 'input window, operand 1, single buffered']
    #allocation6 [shape = 's32[1]{0}', space=sflag, size = 0x4, scoped, tag = 'scoped memory for tpu_custom_call.1']
    #allocation7 [shape = 'u8[4096]{0}', space=vmem, size = 0x1000, scoped, tag = 'input window, operand 2, single buffered']
    #allocation8 [shape = 'u8[8192]{0}', space=vmem, size = 0x2000, scoped, tag = 'input window, operand 3, single buffered']
    #allocation9 [shape = 's32[1]{0}', space=sflag, size = 0x4, scoped, tag = 'scoped memory for tpu_custom_call.1']
    #allocation10 [shape = 'u8[16384]{0}', space=vmem, size = 0x4000, scoped, tag = 'input window, operand 4, single buffered']
    #allocation11 [shape = 'u8[4096]{0}', space=vmem, size = 0x1000, scoped, tag = 'output window, operand 0, single buffered']
    %11 = vsyncpa [#allocation3], 0
    %12 = vsyncpa [#allocation6], 0
    %13 = vsyncpa [#allocation9], 0
    %14 = vsyncpa [#allocation4], 0
    // Predicated region
    $region2: #{tpu_custom_call.1} parent=1 // pred_check
      _
    $region3: #{tpu_custom_call.1} parent=1 // pred_check_branch
      %16 = sbr.rel (0) target = $region5
    $region4: #{tpu_custom_call.1} parent=1 // pred_region
      %s18 = ssub.s32 128, 128
      %19 = vsyncadd [#allocation3], %s18
      %s21 = sshll.u32 [#allocation2], 4
      %s22 = int_to_ptr.vmem [resolvable:$true] %s21
      %24 = dma.hbm_to_vmem [thread:$0]  %s0, 128, %s22, [#allocation3]
    $region5: #{tpu_custom_call.1} parent=1 // pred_fallthru
      _
    // Predicated region
    $region6: #{tpu_custom_call.1} parent=1 // pred_check
      _
    $region7: #{tpu_custom_call.1} parent=1 // pred_check_branch
      %26 = sbr.rel (0) target = $region9
    $region8: #{tpu_custom_call.1} parent=1 // pred_region
      %s28 = ssub.s32 128, 128
      %29 = vsyncadd [#allocation6], %s28
      %s31 = sshll.u32 [#allocation5], 4
      %s32 = int_to_ptr.vmem [resolvable:$true] %s31
      %34 = dma.hbm_to_vmem [thread:$0]  %s1, 128, %s32, [#allocation6]
    $region9: #{tpu_custom_call.1} parent=1 // pred_fallthru
      _
    // Predicated region
    $region10: #{tpu_custom_call.1} parent=1 // pred_check
      _
    $region11: #{tpu_custom_call.1} parent=1 // pred_check_branch
      %36 = sbr.rel (0) target = $region13
    $region12: #{tpu_custom_call.1} parent=1 // pred_region
      %s38 = ssub.s32 128, 128
      %39 = vsyncadd [#allocation6], %s38
      %s41 = sshll.u32 [#allocation7], 4
      %s42 = int_to_ptr.vmem [resolvable:$true] %s41
      %44 = dma.hbm_to_vmem [thread:$0]  %s2, 128, %s42, [#allocation6]
    $region13: #{tpu_custom_call.1} parent=1 // pred_fallthru
      _
    // Predicated region
    $region14: #{tpu_custom_call.1} parent=1 // pred_check
      _
    $region15: #{tpu_custom_call.1} parent=1 // pred_check_branch
      %46 = sbr.rel (0) target = $region17
    $region16: #{tpu_custom_call.1} parent=1 // pred_region
      %s48 = ssub.s32 256, 256
      %49 = vsyncadd [#allocation9], %s48
      %s50 = sshll.u32 [#allocation8], 4
      %s51 = int_to_ptr.vmem [resolvable:$true] %s50
      %56 = dma.hbm_to_vmem [thread:$0]  %s3, 256, %s51, [#allocation9], 128, 128, 8
    $region17: #{tpu_custom_call.1} parent=1 // pred_fallthru
      _
    // Predicated region
    $region18: #{tpu_custom_call.1} parent=1 // pred_check
      _
    $region19: #{tpu_custom_call.1} parent=1 // pred_check_branch
      %58 = sbr.rel (0) target = $region21
    $region20: #{tpu_custom_call.1} parent=1 // pred_region
      %s60 = ssub.s32 512, 512
      %61 = vsyncadd [#allocation9], %s60
      %s62 = sshll.u32 [#allocation10], 4
      %s63 = int_to_ptr.vmem [resolvable:$true] %s62
      %68 = dma.hbm_to_vmem [thread:$0]  %s4, 512, %s63, [#allocation9], 128, 128, 8
    $region21: #{tpu_custom_call.1} parent=1 // pred_fallthru
      _
    // Predicated region
    $region22: #{tpu_custom_call.1} parent=1 // pred_check
      _
    $region23: #{tpu_custom_call.1} parent=1 // pred_check_branch
      %70 = sbr.rel (0) target = $region25
    $region24: #{tpu_custom_call.1} parent=1 // pred_region
      _
    $region25: #{tpu_custom_call.1} parent=1 // pred_fallthru
      _
    // Predicated region
    $region26: #{tpu_custom_call.1} parent=1 // pred_check
      _
    $region27: #{tpu_custom_call.1} parent=1 // pred_check_branch
      %72 = sbr.rel (0) target = $region29
    $region28: #{tpu_custom_call.1} parent=1 // pred_region
      %73 = dma.done [#allocation3], 128
    $region29: #{tpu_custom_call.1} parent=1 // pred_fallthru
      _
    // Predicated region
    $region30: #{tpu_custom_call.1} parent=1 // pred_check
      _
    $region31: #{tpu_custom_call.1} parent=1 // pred_check_branch
      %75 = sbr.rel (0) target = $region33
    $region32: #{tpu_custom_call.1} parent=1 // pred_region
      %76 = dma.done [#allocation6], 128
    $region33: #{tpu_custom_call.1} parent=1 // pred_fallthru
      _
    // Predicated region
    $region34: #{tpu_custom_call.1} parent=1 // pred_check
      _
    $region35: #{tpu_custom_call.1} parent=1 // pred_check_branch
      %78 = sbr.rel (0) target = $region37
    $region36: #{tpu_custom_call.1} parent=1 // pred_region
      %79 = dma.done [#allocation6], 128
    $region37: #{tpu_custom_call.1} parent=1 // pred_fallthru
      _
    // Predicated region
    $region38: #{tpu_custom_call.1} parent=1 // pred_check
      _
    $region39: #{tpu_custom_call.1} parent=1 // pred_check_branch
      %81 = sbr.rel (0) target = $region41
    $region40: #{tpu_custom_call.1} parent=1 // pred_region
      %82 = dma.done [#allocation9], 256
    $region41: #{tpu_custom_call.1} parent=1 // pred_fallthru
      _
    // Predicated region
    $region42: #{tpu_custom_call.1} parent=1 // pred_check
      _
    $region43: #{tpu_custom_call.1} parent=1 // pred_check_branch
      %84 = sbr.rel (0) target = $region45
    $region44: #{tpu_custom_call.1} parent=1 // pred_region
      %85 = dma.done [#allocation9], 512
    $region45: #{tpu_custom_call.1} parent=1 // pred_fallthru
      _
    %v86 = vld [vmem:[#allocation2] sm:$0xff]
    %v87 = vld [vmem:[#allocation5] sm:$0xff]
    %v88 = vld [vmem:[#allocation7] sm:$0xff]
    %v89 = vld [vmem:[#allocation8] sm:$0xff]
    %v90 = vld [vmem:[#allocation8 + $0x8] sm:$0xff]
    %v91 = vld [vmem:[#allocation10] sm:$0xff]
    %v92 = vld [vmem:[#allocation10 + $0x8] sm:$0xff]
    %v93 = vld [vmem:[#allocation10 + $0x10] sm:$0xff]
    %v94 = vld [vmem:[#allocation10 + $0x18] sm:$0xff]
    %vm95 = vcmask 261120
    %v97 = vsel %vm95, %v87, 0
    %99 = vmatprep.subr.mxu0 0.0
    %100 = vmatpush1.msra.mxu0 0.0
    %101 = vmatprep.subr.mxu0 0.0
    %102 = vmatpush1.msra.mxu0 0.0
    %103 = vmatprep.subr.mxu0 0.0
    %104 = vmatpush1.msra.mxu0 0.0
    %105 = vmatprep.subr.mxu0 0.0
    %106 = vmatpush1.msra.mxu0 0.0
    %107 = vmatprep.subr.mxu0 0.0
    %108 = vmatpush1.msra.mxu0 0.0
    %109 = vmatprep.subr.mxu0 0.0
    %110 = vmatpush1.msra.mxu0 0.0
    %111 = vmatprep.subr.mxu0 0.0
    %112 = vmatpush1.msra.mxu0 0.0
    %113 = vmatprep.subr.mxu0 0.0
    %114 = vmatpush1.msra.mxu0 0.0
    %115 = vmatprep.subr.mxu0 0.0
    %116 = vmatpush1.msra.mxu0 0.0
    %117 = vmatprep.subr.mxu0 0.0
    %118 = vmatpush1.msra.mxu0 0.0
    %119 = vmatprep.subr.mxu0 0.0
    %120 = vmatpush1.msra.mxu0 0.0
    %121 = vmatprep.subr.mxu0 0.0
    %122 = vmatpush1.msra.mxu0 0.0
    %123 = vmatprep.subr.mxu0 0.0
    %124 = vmatpush1.msra.mxu0 %v94
    %125 = vmatprep.subr.mxu0 0.0
    %126 = vmatpush1.msra.mxu0 %v93
    %127 = vmatprep.subr.mxu0 0.0
    %128 = vmatpush1.msra.mxu0 %v92
    %129 = vmatprep.subr.mxu0 0.0
    %130 = vmatpush1.msra.mxu0 %v91
    %131 = vmatprep.subr.mxu0 0.0
    %132 = vmatpush2.msra.mxu0 0.0
    %133 = vmatprep.subr.mxu0 0.0
    %134 = vmatpush2.msra.mxu0 0.0
    %135 = vmatprep.subr.mxu0 0.0
    %136 = vmatpush2.msra.mxu0 0.0
    %137 = vmatprep.subr.mxu0 0.0
    %138 = vmatpush2.msra.mxu0 0.0
    %139 = vmatprep.subr.mxu0 0.0
    %140 = vmatpush2.msra.mxu0 0.0
    %141 = vmatprep.subr.mxu0 0.0
    %142 = vmatpush2.msra.mxu0 0.0
    %143 = vmatprep.subr.mxu0 0.0
    %144 = vmatpush2.msra.mxu0 0.0
    %145 = vmatprep.subr.mxu0 0.0
    %146 = vmatpush2.msra.mxu0 0.0
    %147 = vmatprep.subr.mxu0 0.0
    %148 = vmatpush2.msra.mxu0 0.0
    %149 = vmatprep.subr.mxu0 0.0
    %150 = vmatpush2.msra.mxu0 0.0
    %151 = vmatprep.subr.mxu0 0.0
    %152 = vmatpush2.msra.mxu0 0.0
    %153 = vmatprep.subr.mxu0 0.0
    %154 = vmatpush2.msra.mxu0 0.0
    %155 = vmatprep.subr.mxu0 0.0
    %156 = vmatpush2.msra.mxu0 0.0
    %157 = vmatprep.subr.mxu0 0.0
    %158 = vmatpush2.msra.mxu0 0.0
    %159 = vmatprep.subr.mxu0 0.0
    %160 = vmatpush2.msra.mxu0 0.0
    %161 = vmatprep.subr.mxu0 0.0
    %162 = vmatpush2.msra.mxu0 0.0
    %163 = vmatprep.mubr.f32.mxu0 0.0
    %164 = vmatmul.mubr.f32.gmra.mxu0 %v97
    %v165 = vpop.f32.mrf.mxu0
    %v166 = vadd.f32 0.0, %v165
    %v167 = vpop.f32.mrf.mxu0
    %168 = vdwg.mxu0
    %vm169 = vcmask 130048
    %v171 = vsel %vm169, %v86, 0
    %173 = vmatprep.subr.mxu0 0.0
    %174 = vmatpush1.msra.mxu0 0.0
    %175 = vmatprep.subr.mxu0 0.0
    %176 = vmatpush1.msra.mxu0 0.0
    %177 = vmatprep.subr.mxu0 0.0
    %178 = vmatpush1.msra.mxu0 0.0
    %179 = vmatprep.subr.mxu0 0.0
    %180 = vmatpush1.msra.mxu0 0.0
    %181 = vmatprep.subr.mxu0 0.0
    %182 = vmatpush1.msra.mxu0 0.0
    %183 = vmatprep.subr.mxu0 0.0
    %184 = vmatpush1.msra.mxu0 0.0
    %185 = vmatprep.subr.mxu0 0.0
    %186 = vmatpush1.msra.mxu0 0.0
    %187 = vmatprep.subr.mxu0 0.0
    %188 = vmatpush1.msra.mxu0 0.0
    %189 = vmatprep.subr.mxu0 0.0
    %190 = vmatpush1.msra.mxu0 0.0
    %191 = vmatprep.subr.mxu0 0.0
    %192 = vmatpush1.msra.mxu0 0.0
    %193 = vmatprep.subr.mxu0 0.0
    %194 = vmatpush1.msra.mxu0 0.0
    %195 = vmatprep.subr.mxu0 0.0
    %196 = vmatpush1.msra.mxu0 0.0
    %197 = vmatprep.subr.mxu0 0.0
    %198 = vmatpush1.msra.mxu0 0.0
    %199 = vmatprep.subr.mxu0 0.0
    %200 = vmatpush1.msra.mxu0 0.0
    %201 = vmatprep.subr.mxu0 0.0
    %202 = vmatpush1.msra.mxu0 %v90
    %203 = vmatprep.subr.mxu0 0.0
    %204 = vmatpush1.msra.mxu0 %v89
    %205 = vmatprep.subr.mxu0 0.0
    %206 = vmatpush2.msra.mxu0 0.0
    %207 = vmatprep.subr.mxu0 0.0
    %208 = vmatpush2.msra.mxu0 0.0
    %209 = vmatprep.subr.mxu0 0.0
    %210 = vmatpush2.msra.mxu0 0.0
    %211 = vmatprep.subr.mxu0 0.0
    %212 = vmatpush2.msra.mxu0 0.0
    %213 = vmatprep.subr.mxu0 0.0
    %214 = vmatpush2.msra.mxu0 0.0
    %215 = vmatprep.subr.mxu0 0.0
    %216 = vmatpush2.msra.mxu0 0.0
    %217 = vmatprep.subr.mxu0 0.0
    %218 = vmatpush2.msra.mxu0 0.0
    %219 = vmatprep.subr.mxu0 0.0
    %220 = vmatpush2.msra.mxu0 0.0
    %221 = vmatprep.subr.mxu0 0.0
    %222 = vmatpush2.msra.mxu0 0.0
    %223 = vmatprep.subr.mxu0 0.0
    %224 = vmatpush2.msra.mxu0 0.0
    %225 = vmatprep.subr.mxu0 0.0
    %226 = vmatpush2.msra.mxu0 0.0
    %227 = vmatprep.subr.mxu0 0.0
    %228 = vmatpush2.msra.mxu0 0.0
    %229 = vmatprep.subr.mxu0 0.0
    %230 = vmatpush2.msra.mxu0 0.0
    %231 = vmatprep.subr.mxu0 0.0
    %232 = vmatpush2.msra.mxu0 0.0
    %233 = vmatprep.subr.mxu0 0.0
    %234 = vmatpush2.msra.mxu0 0.0
    %235 = vmatprep.subr.mxu0 0.0
    %236 = vmatpush2.msra.mxu0 0.0
    %237 = vmatprep.mubr.f32.mxu0 0.0
    %238 = vmatmul.mubr.f32.gmra.mxu0 %v171
    %v239 = vpop.f32.mrf.mxu0
    %v240 = vadd.f32 %v166, %v239
    %v241 = vpop.f32.mrf.mxu0
    %242 = vdwg.mxu0
    %v243 = vld [vmem:[%s5] sm:$0x1]
    %v245 = vlaneseq
    %v246 = vshrl.u32 %v245, 7
    %v247 = vsub.s32 0, %v246
    %v248 = vrot.slane %v243, %v247
    %v250 = vadd.f32 %v240, %v248
    %v251 = vxor.u32 %v250, 2147483648
    %v252 = vmul.f32 %v251, 1.442695
    %v253 = vpow.pop %v252
    %v254 = vadd.f32 %v253, 1.0
    %v255 = vrcp.pop %v254
    %v256 = vmul.f32 1.0, %v255
    %v257 = vtanh.pop %v250
    %259 = vrot.lane.b32.xlu0 %v88, 32
    %v260 = vpop.permute.xlu0 %259
    %v262 = vmul.f32 %v256, %v260
    %264 = vrot.lane.b32.xlu0 %v257, 32
    %v265 = vpop.permute.xlu0 %264
    %v267 = vmul.f32 %v256, %v265
    %269 = vrot.lane.b32.xlu0 %v267, 32
    %v270 = vpop.permute.xlu0 %269
    %v272 = vadd.f32 %v262, %v270
    %v273 = vtanh.pop %v272
    %275 = vrot.lane.b32.xlu0 %v273, 32
    %v276 = vpop.permute.xlu0 %275
    %v278 = vmul.f32 %v256, %v276
    %280 = vrot.lane.b32.xlu0 %v278, 64
    %v281 = vpop.permute.xlu0 %280
    %v283 = vsel %vm95, %v281, %v272
    %vm284 = vcmask 523264
    %285 = vst.msk [vmem:[#allocation11] sm:$0xff] %vm284, %v283
    // Predicated region
    $region46: #{tpu_custom_call.1} parent=1 // pred_check
      _
    $region47: #{tpu_custom_call.1} parent=1 // pred_check_branch
      %287 = sbr.rel (0) target = $region49
    $region48: #{tpu_custom_call.1} parent=1 // pred_region
      %s289 = ssub.s32 128, 128
      %290 = vsyncadd [#allocation4], %s289
      %s292 = sshll.u32 [#allocation11], 4
      %s293 = int_to_ptr.vmem [resolvable:$true] %s292
      %295 = dma.vmem_to_hbm [thread:$0]  %s293, 128, %s6, [#allocation4]
    $region49: #{tpu_custom_call.1} parent=1 // pred_fallthru
      _
    // Predicated region
    $region50: #{tpu_custom_call.1} parent=1 // pred_check
      _
    $region51: #{tpu_custom_call.1} parent=1 // pred_check_branch
      %297 = sbr.rel (0) target = $region53
    $region52: #{tpu_custom_call.1} parent=1 // pred_region
      %298 = dma.done [#allocation4], 128
    $region53: #{tpu_custom_call.1} parent=1 // pred_fallthru
      _
    %299 = vsyncpa [#allocation3], 1
    %300 = vsyncpa [#allocation6], 1
    %301 = vsyncpa [#allocation9], 1
    %302 = vsyncpa [#allocation4], 1

</llo_original>
